<compile_context>
chip_gen: v6e
topology: v6e:2x2x1
jax: 0.10.0
libtpu: 0.0.40
codegen_flags: <defaults>
</compile_context>

<pallas_src>
import functools
import math
import numbers

import numpy as np
import jax
import jax.numpy as jnp
from jax.experimental import pallas as pl
from jax.experimental.pallas import tpu as pltpu


# ---------------------------------------------------------------------------
# Parameter construction (mirrors GaussianSmoothing.__init__ exactly).
# NOTE: the tap formula intentionally reproduces the torch module's
# exp(-((x - mean) / (2*std))**2) (variance off by 2x vs a textbook Gaussian).
# ---------------------------------------------------------------------------
def _normalize_args(kernel_size, sigma, dim):
    if isinstance(kernel_size, numbers.Number):
        kernel_size = [int(kernel_size)] * dim
    else:
        kernel_size = [int(k) for k in kernel_size]
    if isinstance(sigma, numbers.Number):
        sigma = [float(sigma)] * dim
    else:
        sigma = [float(s) for s in sigma]
    sigma = [max(s, 1e-12) for s in sigma]     # module does sigma = max(sigma, 1e-12)
    return kernel_size, sigma


def gaussian_taps_1d(kernel_size, sigma, dim=3):
    """Per-axis normalized 1D taps; their outer product == the module's 3D kernel."""
    ks, sig = _normalize_args(kernel_size, sigma, dim)
    taps = []
    for size, std in zip(ks, sig):
        m = np.arange(size, dtype=np.float32)
        mean = (size - 1) / 2
        g = (1.0 / (std * math.sqrt(2.0 * math.pi))) * np.exp(
            -(((m - mean) / (2.0 * std)) ** 2))
        g = g / g.sum()
        taps.append(tuple(float(v) for v in g))
    return taps  # [taps_d, taps_h, taps_w]


def gaussian_kernel_3d(kernel_size, sigma, dim=3):
    """Full (Kd,Kh,Kw) kernel built exactly like the torch module (for the reference)."""
    ks, sig = _normalize_args(kernel_size, sigma, dim)
    grids = np.meshgrid(*[np.arange(s, dtype=np.float32) for s in ks], indexing="ij")
    kernel = np.ones((), dtype=np.float32)
    for size, std, mgrid in zip(ks, sig, grids):
        mean = (size - 1) / 2
        kernel = kernel * (1.0 / (std * math.sqrt(2.0 * math.pi)) *
                           np.exp(-(((mgrid - mean) / (2.0 * std)) ** 2)))
    return (kernel / kernel.sum()).astype(np.float32)


def _symmetric_pairs(taps):
    """Group mirror-symmetric taps so each pass computes t*(x_left + x_right):
    fewer VPU multiplies per output vreg. Falls back to per-tap terms if asymmetric."""
    K = len(taps)
    pairs = []
    for k in range((K + 1) // 2):
        j = K - 1 - k
        if j == k:
            pairs.append((taps[k], (k,)))
        elif abs(taps[k] - taps[j]) <= 1e-12 * max(abs(taps[k]), abs(taps[j]), 1.0):
            pairs.append((taps[k], (k, j)))
        else:
            pairs.append((taps[k], (k,)))
            pairs.append((taps[j], (j,)))
    return tuple(pairs)


# ---------------------------------------------------------------------------
# Shared compute: three separable passes on a lane-dense (..., D*, L) slab.
#   load_d_tap(kd) -> f32 array of the output-depth rows shifted by kd along D.
# W/H passes are lane rolls; wrap-around only pollutes columns w >= Wo (cropped by
# the wrapper) and rows h >= Ho (cropped in-kernel by the lane slice to Ho*W).
# ---------------------------------------------------------------------------
def _separable_passes(load_d_tap, W, pairs_d, pairs_h, pairs_w):
    # Pass 1 — D axis (ref-offset loads, no full-x materialization).
    y = None
    for coeff, offs in pairs_d:
        term = load_d_tap(offs[0])
        for kd in offs[1:]:
            term = term + load_d_tap(kd)
        y = coeff * term if y is None else y + coeff * term

    lane_axis = y.ndim - 1
    L = y.shape[lane_axis]

    def shifted(v, n):          # out[p] = v[p + n] (circular; wrap lands in the halo)
        return v if n == 0 else pltpu.roll(v, shift=L - n, axis=lane_axis)

    # Pass 2 — W axis: "+kw" shift on the lane axis.
    z = None
    for coeff, offs in pairs_w:
        term = None
        for kw in offs:
            s = shifted(y, kw)
            term = s if term is None else term + s
        z = coeff * term if z is None else z + coeff * term

    # Pass 3 — H axis: "+kh" rows == "+kh*W" lanes.
    acc = None
    for coeff, offs in pairs_h:
        term = None
        for kh in offs:
            s = shifted(z, kh * W)
            term = s if term is None else term + s
        acc = coeff * term if acc is None else acc + coeff * term
    return acc


# ---------------------------------------------------------------------------
# Fast path kernel: auto-pipelined blocks over B = N*C.
#   x_ref: (Bb, D, L) VMEM       o_ref: (Bb, Do, Ho*W) VMEM
# ---------------------------------------------------------------------------
def _smooth3d_kernel(x_ref, o_ref, *, pairs_d, pairs_h, pairs_w, W, Do, HoW):
    def load_d_tap(kd):
        return x_ref[:, kd:kd + Do, :].astype(jnp.float32)

    acc = _separable_passes(load_d_tap, W, pairs_d, pairs_h, pairs_w)
    # Keep only the first Ho*W lanes (rows 0..Ho-1): the H halo never leaves VMEM.
    o_ref[...] = acc[:, :, :HoW].astype(o_ref.dtype)


# ---------------------------------------------------------------------------
# Large-volume fallback: per-B manual D-halo tiling (double-buffered DMAs).
#   x_hbm: (B, D, L) in HBM (pl.ANY)     o_hbm: (B, Do, Ho*W) in HBM (pl.ANY)
# ---------------------------------------------------------------------------
def _smooth3d_dtile_kernel(x_hbm, o_hbm, xbuf, obuf, in_sem, out_sem, *,
                           pairs_d, pairs_h, pairs_w, W, Do, Dt, Din, HoW, n_chunks):
    b = pl.program_id(0)

    def chunk_start(c):          # clamp: last chunk overlaps previous one (rewrites same values)
        return min(c * Dt, Do - Dt)

    def in_copy(c, slot):
        r0 = chunk_start(c)
        return pltpu.make_async_copy(x_hbm.at[b, pl.ds(r0, Din), :],
                                     xbuf.at[slot], in_sem.at[slot])

    def out_copy(c, slot):
        r0 = chunk_start(c)
        return pltpu.make_async_copy(obuf.at[slot],
                                     o_hbm.at[b, pl.ds(r0, Dt), :], out_sem.at[slot])

    in_copy(0, 0).start()
    for c in range(n_chunks):                 # static, unrolled chunk loop
        slot = c & 1
        in_copy(c, slot).wait()
        if c + 1 < n_chunks:                  # prefetch next window into the other slot
            in_copy(c + 1, 1 - slot).start()

        def load_d_tap(kd, _slot=slot):
            return xbuf[_slot, kd:kd + Dt, :].astype(jnp.float32)

        acc = _separable_passes(load_d_tap, W, pairs_d, pairs_h, pairs_w)

        if c >= 2:                            # this slot's previous out-DMA must land first
            out_copy(c - 2, slot).wait()
        obuf[slot] = acc[:, :HoW].astype(obuf.dtype)
        out_copy(c, slot).start()

    for c in range(max(0, n_chunks - 2), n_chunks):
        out_copy(c, c & 1).wait()


# ---------------------------------------------------------------------------
# Hardware-aware sizing helpers.
# ---------------------------------------------------------------------------
def _vmem_capacity_bytes():
    try:
        info = pltpu.get_tpu_info()
        cap = int(getattr(info, "vmem_capacity_bytes", 0) or 0)
        if cap > 0:
            return cap
    except Exception:
        pass
    return 64 * 1024 * 1024        # conservative default (v7x per-TensorCore VMEM)


def _num_tensorcores():
    try:
        return max(1, int(getattr(jax.devices()[0], "num_cores", 1) or 1))
    except Exception:
        return 1


# ---------------------------------------------------------------------------
# Wrapper == module.forward(x) for x:(N, C, D, H, W).
# ---------------------------------------------------------------------------
def gaussian_smoothing_3d(x, kernel_size, sigma, *, d_tile=None, vmem_budget_bytes=None):
    N, C, D, H, W = x.shape
    taps_d, taps_h, taps_w = gaussian_taps_1d(kernel_size, sigma, dim=3)
    Kd, Kh, Kw = len(taps_d), len(taps_h), len(taps_w)
    Do, Ho, Wo = D - Kd + 1, H - Kh + 1, W - Kw + 1
    assert Do > 0 and Ho > 0 and Wo > 0, "kernel larger than input (valid conv)"

    B = N * C                     # taps identical per channel -> fold N and C
    L = H * W                     # lane-dense flattened spatial plane
    HoW = Ho * W                  # lanes kept by the kernel (H halo cropped in-kernel)
    xf = x.reshape(B, D, L)

    pairs_d = _symmetric_pairs(taps_d)
    pairs_h = _symmetric_pairs(taps_h)
    pairs_w = _symmetric_pairs(taps_w)

    itemsize = x.dtype.itemsize
    vmem_cap = _vmem_capacity_bytes()
    budget = (vmem_budget_bytes if vmem_budget_bytes is not None
              else min(vmem_cap // 2, 48 << 20))
    vmem_limit = int(max(budget, min(vmem_cap * 3 // 4, budget + (16 << 20))))

    # Per-B fast-path VMEM footprint: double-buffered in/out blocks + ~3 f32 temps.
    per_b = (2 * D * L + 2 * Do * HoW) * itemsize + 3 * Do * L * 4
    use_dtile = (d_tile is not None) or (per_b > budget)

    if not use_dtile:
        # ---------------- fast path: B-blocked, BlockSpec auto-pipelined ------------
        min_steps = max(4, 2 * _num_tensorcores())   # keep both TCs + the pipeline busy
        bb_cap = max(1, budget // per_b)
        Bb = max(1, min(bb_cap, pl.cdiv(B, min_steps)))
        grid = (pl.cdiv(B, Bb),)                     # Bb need NOT divide B (boundary block ok)

        kern = functools.partial(_smooth3d_kernel, pairs_d=pairs_d, pairs_h=pairs_h,
                                 pairs_w=pairs_w, W=W, Do=Do, HoW=HoW)
        out_flat = pl.pallas_call(
            kern,
            out_shape=jax.ShapeDtypeStruct((B, Do, HoW), x.dtype),
            grid=grid,
            # TODO(synk): if a trace shows exposed input DMA at this block size, try
            # pipeline_mode=pl.Buffered(3) on the input spec.
            in_specs=[pl.BlockSpec((Bb, D, L), lambda b: (b, 0, 0))],
            out_specs=pl.BlockSpec((Bb, Do, HoW), lambda b: (b, 0, 0)),
            compiler_params=pltpu.CompilerParams(
                dimension_semantics=("parallel",),
                vmem_limit_bytes=vmem_limit),
        )(xf)
    else:
        # ------------- large-volume path: manual double-buffered D-halo tiles -------
        if d_tile is not None:
            Dt = int(min(max(1, d_tile), Do))
        else:
            denom = 2 * (L + HoW) * itemsize + 3 * L * 4
            Dt = max(1, int((budget // 2) // max(denom, 1)))
            if Dt >= 8:
                Dt = (Dt // 8) * 8                   # friendlier sublane alignment
            Dt = min(Dt, Do)
        Din = Dt + Kd - 1
        n_chunks = int(pl.cdiv(Do, Dt))

        kern = functools.partial(_smooth3d_dtile_kernel, pairs_d=pairs_d, pairs_h=pairs_h,
                                 pairs_w=pairs_w, W=W, Do=Do, Dt=Dt, Din=Din, HoW=HoW,
                                 n_chunks=n_chunks)
        out_flat = pl.pallas_call(
            kern,
            out_shape=jax.ShapeDtypeStruct((B, Do, HoW), x.dtype),
            grid=(B,),
            in_specs=[pl.BlockSpec(memory_space=pl.ANY)],
            out_specs=pl.BlockSpec(memory_space=pl.ANY),
            scratch_shapes=[
                pltpu.VMEM((2, Din, L), x.dtype),    # double-buffered input D-window
                pltpu.VMEM((2, Dt, HoW), x.dtype),   # double-buffered output D-tile
                pltpu.SemaphoreType.DMA((2,)),       # input-copy semaphores
                pltpu.SemaphoreType.DMA((2,)),       # output-copy semaphores
            ],
            compiler_params=pltpu.CompilerParams(
                dimension_semantics=("parallel",),
                vmem_limit_bytes=vmem_limit),
        )(xf)

    # Halo contract: the (B, Do, Ho*W) slab still carries the W halo (columns
    # w >= Wo are polluted by the roll wrap-around); the slice below restores exact
    # module semantics.
    # TODO(synk): if the consumer can take (or fuse) the W-padded lane-dense slab,
    # return out_flat.reshape(N, C, Do, Ho, W) directly and skip this slice.
    out = out_flat.reshape(N, C, Do, Ho, W)
    if Wo != W:
        out = out[..., :Wo]
    return out


# ---------------------------------------------------------------------------
# Pure-JAX reference: direct (non-separable) sliding-window depthwise conv3d.
# ---------------------------------------------------------------------------
def ref_forward(x, w3d):
    N, C, D, H, W = x.shape
    Kd, Kh, Kw = w3d.shape
    Do, Ho, Wo = D - Kd + 1, H - Kh + 1, W - Kw + 1
    out = jnp.zeros((N, C, Do, Ho, Wo), jnp.float32)
    for kd in range(Kd):
        for kh in range(Kh):
            for kw in range(Kw):
                out = out + x[:, :, kd:kd + Do, kh:kh + Ho, kw:kw + Wo] * w3d[kd, kh, kw]
    return out.astype(x.dtype)


if __name__ == "__main__":
    channels, kernel_size, sigma = 4, 3, 1.0
    N, C, D, H, W = 2, channels, 8, 8, 16

    key = jax.random.PRNGKey(0)
    x = jax.random.normal(key, (N, C, D, H, W), dtype=jnp.float32)

    w3d = jnp.asarray(gaussian_kernel_3d(kernel_size, sigma, dim=3))
    expected = ref_forward(x, w3d)
    exp_shape = (N, C, D - kernel_size + 1, H - kernel_size + 1, W - kernel_size + 1)

    # Fast path (B-blocked, auto-pipelined).
    out = gaussian_smoothing_3d(x, kernel_size, sigma)
    out = jax.block_until_ready(out)
    assert out.shape == exp_shape, out.shape
    assert jnp.allclose(out, expected, atol=1e-5, rtol=1e-5), (
        "fast path mismatch: max abs diff = "
        f"{float(jnp.max(jnp.abs(out - expected)))}")

    # Large-volume fallback path (manual D-halo tiling), forced with a small tile.
    out_tiled = gaussian_smoothing_3d(x, kernel_size, sigma, d_tile=4)
    out_tiled = jax.block_until_ready(out_tiled)
    assert out_tiled.shape == exp_shape, out_tiled.shape
    assert jnp.allclose(out_tiled, expected, atol=1e-5, rtol=1e-5), (
        "d-tile path mismatch: max abs diff = "
        f"{float(jnp.max(jnp.abs(out_tiled - expected)))}")

    print("KERNEL_OK")
</pallas_src>

<mosaic_0001>
module attributes {stable_mosaic.version = 11 : i64} {
  func.func @_smooth3d_kernel(%arg0: i32, %arg1: memref<2x8x128xf32, #tpu.memory_space<vmem>>, %arg2: memref<2x6x96xf32, #tpu.memory_space<vmem>>) attributes {dimension_semantics = [#tpu.dimension_semantics<parallel>], iteration_bounds = array<i64: 4>, scalar_prefetch = 0 : i64, scratch_operands = 0 : i64, tpu.core_type = #tpu.core_type<tc>, window_params = [{transform_indices = @transform_0, window_bounds = array<i64: 2, 8, 128>}, {transform_indices = @transform_1, window_bounds = array<i64: 2, 6, 96>}]} {
    %c0 = arith.constant 0 : index
    %c0_0 = arith.constant 0 : index
    %c0_1 = arith.constant 0 : index
    %0 = vector.load %arg1[%c0, %c0_0, %c0_1] : memref<2x8x128xf32, #tpu.memory_space<vmem>>, vector<2x6x128xf32>
    %c0_2 = arith.constant 0 : index
    %c2 = arith.constant 2 : index
    %c0_3 = arith.constant 0 : index
    %1 = vector.load %arg1[%c0_2, %c2, %c0_3] : memref<2x8x128xf32, #tpu.memory_space<vmem>>, vector<2x6x128xf32>
    %2 = arith.addf %0, %1 : vector<2x6x128xf32>
    %cst = arith.constant 0.304504305 : f32
    %3 = vector.broadcast %cst : f32 to vector<2x6x128xf32>
    %4 = arith.mulf %3, %2 : vector<2x6x128xf32>
    %c0_4 = arith.constant 0 : index
    %c1 = arith.constant 1 : index
    %c0_5 = arith.constant 0 : index
    %5 = vector.load %arg1[%c0_4, %c1, %c0_5] : memref<2x8x128xf32, #tpu.memory_space<vmem>>, vector<2x6x128xf32>
    %cst_6 = arith.constant 0.3909913 : f32
    %6 = vector.broadcast %cst_6 : f32 to vector<2x6x128xf32>
    %7 = arith.mulf %6, %5 : vector<2x6x128xf32>
    %8 = arith.addf %4, %7 : vector<2x6x128xf32>
    %c126_i32 = arith.constant 126 : i32
    %9 = tpu.dynamic_rotate %8 by %c126_i32 dim 2 : vector<2x6x128xf32>, i32 -> vector<2x6x128xf32>
    %10 = arith.addf %8, %9 : vector<2x6x128xf32>
    %cst_7 = arith.constant 0.304504305 : f32
    %11 = vector.broadcast %cst_7 : f32 to vector<2x6x128xf32>
    %12 = arith.mulf %11, %10 : vector<2x6x128xf32>
    %c127_i32 = arith.constant 127 : i32
    %13 = tpu.dynamic_rotate %8 by %c127_i32 dim 2 : vector<2x6x128xf32>, i32 -> vector<2x6x128xf32>
    %cst_8 = arith.constant 0.3909913 : f32
    %14 = vector.broadcast %cst_8 : f32 to vector<2x6x128xf32>
    %15 = arith.mulf %14, %13 : vector<2x6x128xf32>
    %16 = arith.addf %12, %15 : vector<2x6x128xf32>
    %c96_i32 = arith.constant 96 : i32
    %17 = tpu.dynamic_rotate %16 by %c96_i32 dim 2 : vector<2x6x128xf32>, i32 -> vector<2x6x128xf32>
    %18 = arith.addf %16, %17 : vector<2x6x128xf32>
    %cst_9 = arith.constant 0.304504305 : f32
    %19 = vector.broadcast %cst_9 : f32 to vector<2x6x128xf32>
    %20 = arith.mulf %19, %18 : vector<2x6x128xf32>
    %c112_i32 = arith.constant 112 : i32
    %21 = tpu.dynamic_rotate %16 by %c112_i32 dim 2 : vector<2x6x128xf32>, i32 -> vector<2x6x128xf32>
    %cst_10 = arith.constant 0.3909913 : f32
    %22 = vector.broadcast %cst_10 : f32 to vector<2x6x128xf32>
    %23 = arith.mulf %22, %21 : vector<2x6x128xf32>
    %24 = arith.addf %20, %23 : vector<2x6x128xf32>
    %25 = vector.extract_strided_slice %24 {offsets = [0, 0, 0], sizes = [2, 6, 96], strides = [1, 1, 1]} : vector<2x6x128xf32> to vector<2x6x96xf32>
    %c0_11 = arith.constant 0 : index
    %c0_12 = arith.constant 0 : index
    %c0_13 = arith.constant 0 : index
    %26 = vector.load %arg2[%c0_11, %c0_12, %c0_13] : memref<2x6x96xf32, #tpu.memory_space<vmem>>, vector<2x6x96xf32>
    tpu.vector_store %arg2[%c0_11, %c0_12, %c0_13], %25 {strides = array<i32>} : memref<2x6x96xf32, #tpu.memory_space<vmem>>, vector<2x6x96xf32>,
    return
  }
  func.func @transform_0(%arg0: i32) -> (i32, i32, i32) {
    %c0_i32 = arith.constant 0 : i32
    %c0_i32_0 = arith.constant 0 : i32
    %c0_i32_1 = arith.constant 0 : i32
    return %arg0, %c0_i32, %c0_i32_0 : i32, i32, i32
  }
  func.func @transform_1(%arg0: i32) -> (i32, i32, i32) {
    %c0_i32 = arith.constant 0 : i32
    %c0_i32_0 = arith.constant 0 : i32
    %c0_i32_1 = arith.constant 0 : i32
    return %arg0, %c0_i32, %c0_i32_0 : i32, i32, i32
  }
}

</mosaic_0001>

<llo_original>
// kernel: tpu_custom_call.1
$region0: #{tpu_custom_call.1}
  #allocation0 [shape = 'u32[]', space=smem, size = 0x4, offset = 0x4, fixed_abs, tag = 'smem constant byte address 0x4 - core index']
  #allocation1 [shape = 'u32[144,128]{1,0:T(1,128)}', space=vmem, size = 0x12000, scoped, tag = 'internal scratch']
  %s0 = inlined_call_operand.hbm [shape: f32[8,8,128], index: 0, kind: input, shape index: {}]
  %s1 = inlined_call_operand.vmem [shape: f32[8,6,96], index: 1, kind: output, shape index: {}]
  %s2 = sld [smem:[#allocation0]]
  $region41: #{tpu_custom_call.1} parent=0
    _
  %s4 = ssub.s32 1, %s2
  %s5 = scalar_select 0, %s4, %s2
  $region1: #{tpu_custom_call.1} parent=0
    #allocation2 [shape = 'u8[16384]{0}', space=vmem, size = 0x4000, scoped, tag = 'input window, operand 0']
    #allocation3 [shape = 's32[2]{0}', space=sflag, size = 0x8, scoped, tag = 'scoped memory for tpu_custom_call.1']
    %6 = vsyncpa [#allocation3], 0
    %s7 = scalar_lea.sflag [#allocation3], 1
    %8 = vsyncpa %s7, 0
    loop: start=0, step=1, limit=6
    $region2: #{tpu_custom_call.1} parent=1 // loop_pre_header
      _
    $region3: #{tpu_custom_call.1} parent=1 // loop_header
      %s10 = sphi 0, %s14
      %p11 = scmp.ge.s32.totalorder %s10, 6
      %s20 = sphi 0, %s22
      %s23 = sphi 0, %s20
      %s24 = sphi 0, %s23
      %s40 = sphi 0, %s24
      %s46 = sphi 0, %s48
      %s49 = sphi 0, %s46
      %s50 = sphi 0, %s49
      %s66 = sphi 0, %s50
    $region4: #{tpu_custom_call.1} parent=1 // loop_header_branch
      %13 = sbr.rel (%p11) target = $region8
    $region5: #{tpu_custom_call.1} parent=1 // loop_body
      %s15 = ssub.s32 %s10, 1
      %s16 = ssub.s32 %s10, 2
      %s17 = sadd.s32 %s10, 1
      %s18 = ssub.s32 %s10, %s17
      %p19 = scmp.eq.s32.totalorder %s18, 0
      %s21 = sadd.s32 %s20, 1
      %s22 = scalar_select %p19, %s20, %s21
      %p25 = pneg %p19
      %p26 = scmp.eq.s32.totalorder %s10, 3
      %p27 = por %p25, %p26
      %p28 = scmp.ne.s32.totalorder %s20, %s23
      %p29 = scmp.eq.s32.totalorder %s10, 0
      %p30 = por %p28, %p29
      %p31 = scmp.ne.s32.totalorder %s20, %s23
      %p32 = scmp.eq.s32.totalorder %s15, 3
      %p33 = por %p31, %p32
      %p34 = scmp.ne.s32.totalorder %s23, %s24
      %p35 = scmp.eq.s32.totalorder %s15, 0
      %p36 = por %p34, %p35
      %p37 = scmp.ne.s32.totalorder %s23, %s24
      %p38 = scmp.eq.s32.totalorder %s16, 3
      %p39 = por %p37, %p38
      %p41 = scmp.ne.s32.totalorder %s24, %s40
      %p42 = scmp.eq.s32.totalorder %s16, 0
      %p43 = por %p41, %p42
      %s44 = ssub.s32 %s10, %s17
      %p45 = scmp.eq.s32.totalorder %s44, 0
      %s47 = sadd.s32 %s46, 1
      %s48 = scalar_select %p45, %s46, %s47
      %p51 = pneg %p45
      %p52 = scmp.eq.s32.totalorder %s10, 3
      %p53 = por %p51, %p52
      %p54 = scmp.ne.s32.totalorder %s46, %s49
      %p55 = scmp.eq.s32.totalorder %s10, 0
      %p56 = por %p54, %p55
      %p57 = scmp.ne.s32.totalorder %s46, %s49
      %p58 = scmp.eq.s32.totalorder %s15, 3
      %p59 = por %p57, %p58
      %p60 = scmp.ne.s32.totalorder %s49, %s50
      %p61 = scmp.eq.s32.totalorder %s15, 0
      %p62 = por %p60, %p61
      %p63 = scmp.ne.s32.totalorder %s49, %s50
      %p64 = scmp.eq.s32.totalorder %s16, 3
      %p65 = por %p63, %p64
      %p67 = scmp.ne.s32.totalorder %s50, %s66
      %p68 = scmp.eq.s32.totalorder %s16, 0
      %p69 = por %p67, %p68
      %p70 = scmp.le.s32.totalorder 1, %s10
      %p71 = scmp.lt.s32.totalorder %s10, 5
      %p72 = pnand %p70, %p71
      %p73 = pneg %p72
      // Predicated region
      $region9: #{tpu_custom_call.1} parent=5 // pred_check
        _
      $region10: #{tpu_custom_call.1} parent=5 // pred_check_branch
        %75 = sbr.rel (%p72) target = $region12
      $region11: #{tpu_custom_call.1} parent=5 // pred_region
        %s76 = ssub.s32 %s10, 1
      $region12: #{tpu_custom_call.1} parent=5 // pred_fallthru
        _
      %p77 = scmp.lt.s32.totalorder %s10, 4
      // Predicated region
      $region13: #{tpu_custom_call.1} parent=5 // pred_check
        %p78 = pneg %p77
      $region14: #{tpu_custom_call.1} parent=5 // pred_check_branch
        %80 = sbr.rel (%p78) target = $region16
      $region15: #{tpu_custom_call.1} parent=5 // pred_region
        // Predicated region
        $region17: #{tpu_custom_call.1} parent=15 // pred_check
          %p81 = pneg %p30
        $region18: #{tpu_custom_call.1} parent=15 // pred_check_branch
          %83 = sbr.rel (%p81) target = $region20
        $region19: #{tpu_custom_call.1} parent=15 // pred_region
          %s84 = sand.u32 %s20, 1
          %s85 = scalar_lea.sflag [#allocation3], %s84
          %s86 = sand.u32 %s20, 1
          %s87 = smul.addr %s86, 16
          %s88 = scalar_lea.vmem [#allocation2], %s87
          %s89 = smul.u32 2, %s10
          %s91 = ssub.s32 256, 256
          %92 = vsyncadd %s85, %s91
          %s93 = smul.addr %s89, 128
          %s94 = scalar_lea.hbm %s0, %s93
          %s95 = sshll.u32 %s88, 4
          %s96 = int_to_ptr.vmem [resolvable:$true] %s95
          %101 = dma.hbm_to_vmem [thread:$0]  %s94, 256, %s96, %s85, 128, 128, 8
        $region20: #{tpu_custom_call.1} parent=15 // pred_fallthru
          _
      $region16: #{tpu_custom_call.1} parent=5 // pred_fallthru
        _
      %p102 = scmp.le.s32.totalorder 1, %s10
      %p103 = scmp.lt.s32.totalorder %s10, 5
      %p104 = pnand %p102, %p103
      %p105 = pneg %p104
      // Predicated region
      $region21: #{tpu_custom_call.1} parent=5 // pred_check
        _
      $region22: #{tpu_custom_call.1} parent=5 // pred_check_branch
        %107 = sbr.rel (%p104) target = $region24
      $region23: #{tpu_custom_call.1} parent=5 // pred_region
        %s108 = ssub.s32 %s10, 1
        %s109 = sand.u32 %s23, 1
        %s110 = scalar_lea.sflag [#allocation3], %s109
        %s111 = sand.u32 %s23, 1
        %s112 = smul.addr %s111, 16
        %s113 = scalar_lea.vmem [#allocation2], %s112
        // Predicated region
        $region25: #{tpu_custom_call.1} parent=23 // pred_check
          %p114 = pneg %p36
        $region26: #{tpu_custom_call.1} parent=23 // pred_check_branch
          %116 = sbr.rel (%p114) target = $region28
        $region27: #{tpu_custom_call.1} parent=23 // pred_region
          %117 = dma.done %s110, 256
        $region28: #{tpu_custom_call.1} parent=23 // pred_fallthru
          _
        %s118 = sand.u32 %s23, 1
        %s119 = scalar_lea.sflag [#allocation3], %s118
        %s120 = sand.u32 %s23, 1
        %s121 = smul.addr %s120, 16
        %s122 = scalar_lea.vmem [#allocation2], %s121
        %p123 = pneg %p36
        %p124 = pneg %p33
        %p125 = pneg %p62
        %p126 = pneg %p59
        %s127 = smul.u32 2, %s15
        %p128 = scmp.lt.s32.totalorder %s127, 7
        %s129 = scalar_select %p128, %s127, 7
        %s130 = smul.addr %s129, 8
        %s131 = scalar_lea.vmem %s1, %s130
        %s132 = smul.u32 2, %s15
        %s133 = smul.u32 2, %s15
        %p134 = scmp.lt.s32.totalorder %s133, 7
        %s135 = scalar_select %p134, %s133, 7
        %s136 = smul.addr %s135, 8
        %s137 = scalar_lea.vmem %s1, %s136
        %s138 = smul.u32 2, %s15
        %v139 = vld [vmem:[%s113] sm:$0x3f]
        %v140 = vld [vmem:[%s113 + $0x8] sm:$0x3f]
        %v141 = vld [vmem:[%s113 + $0x2] sm:$0x3f]
        %v142 = vld [vmem:[%s113 + $0xa] sm:$0x3f]
        %v143 = vadd.f32 %v139, %v141
        %v144 = vadd.f32 %v140, %v142
        %v145 = vmul.f32 %v143, 0.3045043
        %v146 = vmul.f32 %v144, 0.3045043
        %v147 = vld [vmem:[%s113 + $0x1] sm:$0x3f]
        %v148 = vld [vmem:[%s113 + $0x9] sm:$0x3f]
        %v149 = vmul.f32 %v147, 0.3909913
        %v150 = vmul.f32 %v148, 0.3909913
        %v151 = vadd.f32 %v145, %v149
        %v152 = vadd.f32 %v146, %v150
        %153 = vrot.lane.b32.xlu0 %v151, 126
        %v154 = vpop.permute.xlu0 %153
        %155 = vrot.lane.b32.xlu0 %v152, 126
        %v156 = vpop.permute.xlu0 %155
        %v157 = vadd.f32 %v151, %v154
        %v158 = vadd.f32 %v152, %v156
        %v159 = vmul.f32 %v157, 0.3045043
        %v160 = vmul.f32 %v158, 0.3045043
        %161 = vrot.lane.b32.xlu0 %v151, 127
        %v162 = vpop.permute.xlu0 %161
        %163 = vrot.lane.b32.xlu0 %v152, 127
        %v164 = vpop.permute.xlu0 %163
        %v165 = vmul.f32 %v162, 0.3909913
        %v166 = vmul.f32 %v164, 0.3909913
        %v167 = vadd.f32 %v159, %v165
        %v168 = vadd.f32 %v160, %v166
        %169 = vrot.lane.b32.xlu0 %v167, 96
        %v170 = vpop.permute.xlu0 %169
        %171 = vrot.lane.b32.xlu0 %v168, 96
        %v172 = vpop.permute.xlu0 %171
        %v173 = vadd.f32 %v167, %v170
        %v174 = vadd.f32 %v168, %v172
        %v175 = vmul.f32 %v173, 0.3045043
        %v176 = vmul.f32 %v174, 0.3045043
        %177 = vrot.lane.b32.xlu0 %v167, 112
        %v178 = vpop.permute.xlu0 %177
        %179 = vrot.lane.b32.xlu0 %v168, 112
        %v180 = vpop.permute.xlu0 %179
        %v181 = vmul.f32 %v178, 0.3909913
        %v182 = vmul.f32 %v180, 0.3909913
        %v183 = vadd.f32 %v175, %v181
        %v184 = vadd.f32 %v176, %v182
        %vm185 = vcmask 783360
        %186 = vst.msk [vmem:[%s137] sm:$0x3f] %vm185, %v183
        %187 = vst.msk [vmem:[%s137 + $0x8] sm:$0x3f] %vm185, %v184
        %s188 = smul.u32 2, %s15
        %p189 = scmp.lt.s32.totalorder %s188, 7
        %s190 = scalar_select %p189, %s188, 7
        %s191 = smul.addr %s190, 8
        %s192 = scalar_lea.vmem %s1, %s191
        // Predicated region
        $region29: #{tpu_custom_call.1} parent=23 // pred_check
          %p193 = pneg %p59
        $region30: #{tpu_custom_call.1} parent=23 // pred_check_branch
          %195 = sbr.rel (%p193) target = $region32
        $region31: #{tpu_custom_call.1} parent=23 // pred_region
          %s196 = smul.u32 2, %s15
        $region32: #{tpu_custom_call.1} parent=23 // pred_fallthru
          _
      $region24: #{tpu_custom_call.1} parent=5 // pred_fallthru
        _
      %p197 = scmp.le.s32.totalorder 2, %s10
      // Predicated region
      $region33: #{tpu_custom_call.1} parent=5 // pred_check
        %p198 = pneg %p197
      $region34: #{tpu_custom_call.1} parent=5 // pred_check_branch
        %200 = sbr.rel (%p198) target = $region36
      $region35: #{tpu_custom_call.1} parent=5 // pred_region
        %s201 = ssub.s32 %s10, 2
        // Predicated region
        $region37: #{tpu_custom_call.1} parent=35 // pred_check
          %p202 = pneg %p65
        $region38: #{tpu_custom_call.1} parent=35 // pred_check_branch
          %204 = sbr.rel (%p202) target = $region40
        $region39: #{tpu_custom_call.1} parent=35 // pred_region
          %s205 = smul.u32 2, %s16
          %p206 = scmp.lt.s32.totalorder %s205, 7
          %s207 = scalar_select %p206, %s205, 7
          %s208 = smul.addr %s207, 8
          %s209 = scalar_lea.vmem %s1, %s208
        $region40: #{tpu_custom_call.1} parent=35 // pred_fallthru
          _
      $region36: #{tpu_custom_call.1} parent=5 // pred_fallthru
        _
    $region6: #{tpu_custom_call.1} parent=1 // loop_footer
      %s14 = sadd.s32 1, %s10
    $region7: #{tpu_custom_call.1} parent=1 // loop_footer_branch
      %9 = sbr.rel target = $region3
    $region8: #{tpu_custom_call.1} parent=1 // loop_exit
      _
    %210 = vsyncpa [#allocation3], 1
    %s211 = scalar_lea.sflag [#allocation3], 1
    %212 = vsyncpa %s211, 1

</llo_original>
